<compile_context>
chip_gen: v6e
topology: v6e:2x2x1
jax: 0.10.0
libtpu: 0.0.40
codegen_flags: <defaults>
</compile_context>

<pallas_src>
import functools
import math

import jax
import jax.numpy as jnp
from jax.experimental import pallas as pl
from jax.experimental.pallas import tpu as pltpu


def _round_up(a, b):
    return (a + b - 1) // b * b


def _choose_tiles(n):
    """Return (n_pad, tq, tk); tq | n_pad, tk | n_pad, both multiples of 128."""
    if n <= 512:
        # Full-lane (multiple-of-128) padding.  Use >= 2 q-tiles whenever
        # n_pad > 128 so the "parallel" q axis can shard across v7x's 2 TCs.
        n_pad = _round_up(n, 128)
        if n_pad == 128:
            tq = 128
        elif n_pad % 256 == 0:
            tq = n_pad // 2
        else:
            tq = 128
        return n_pad, tq, n_pad
    # Large graphs: 512x512 flash tiles.  ~20 MiB of f32 intermediates for
    # H=8/D=64 -> fits v7x's 64 MiB VMEM and cuts K/V re-reads / per-step
    # overhead vs 256-wide q tiles on v5e/v6e.
    n_pad = _round_up(n, 512)
    return n_pad, 512, 512


def _vmem_limit_bytes():
    try:
        cap = pltpu.get_tpu_info().vmem_capacity_bytes
    except Exception:
        cap = 64 * 1024 * 1024
    # ~25% headroom for Mosaic-internal scratch: ~96 MiB on v5e/v6e (128 MiB
    # physical), ~48 MiB on v7x (64 MiB per TensorCore).
    return max(32 * 1024 * 1024, min(100 * 1024 * 1024, (cap * 3) // 4))


# --------------------------------------------------------------------------
# Kernel A: fused Q|K|V projection for all heads (x_tile @ W_all, bf16 MXU).
# --------------------------------------------------------------------------
def _qkv_proj_kernel(x_ref, w_ref, b_ref, q_ref, k_ref, v_ref, *,
                     nheads, nhid, inv_sqrt_d):
    x = x_ref[...]                                          # (TN, nfeat) bf16
    qkv = jnp.dot(x, w_ref[...],
                  preferred_element_type=jnp.float32)       # (TN, 3*H*D) f32
    qkv = qkv + b_ref[...]                                  # (1, 3*H*D) bias
    hd = nheads * nhid
    q_slab = qkv[:, :hd] * inv_sqrt_d      # 1/sqrt(d) folded once (hoisted)
    k_slab = qkv[:, hd:2 * hd]
    v_slab = qkv[:, 2 * hd:]
    ones_col = jnp.ones((x.shape[0], 1), jnp.float32)
    for h in range(nheads):
        lo = h * nhid
        q_ref[h] = q_slab[:, lo:lo + nhid].astype(q_ref.dtype)
        k_ref[h] = k_slab[:, lo:lo + nhid].astype(k_ref.dtype)
        # V carries a trailing all-ones column so kernel B's PV matmul also
        # produces the softmax denominator on the MXU (no XLU cross-lane sum).
        v_ref[h] = jnp.concatenate(
            [v_slab[:, lo:lo + nhid], ones_col], axis=-1).astype(v_ref.dtype)


# --------------------------------------------------------------------------
# Kernel B: flash-style masked attention, all heads per step, online softmax.
# --------------------------------------------------------------------------
def _flash_gat_kernel(counts_ref, q_ref, k_ref, v_ref, adj_ref, o_ref,
                      m_scr, acc_scr, *, nheads, nhid):
    qi = pl.program_id(0)
    ki = pl.program_id(1)

    @pl.when(ki == 0)
    def _init():
        m_scr[...] = jnp.full(m_scr.shape, -jnp.inf, jnp.float32)
        acc_scr[...] = jnp.zeros(acc_scr.shape, jnp.float32)

    # Skip (q, k) tiles with no edges (block sparsity): nothing in such a tile
    # survives the mask, so the online-softmax state is unchanged.
    @pl.when(counts_ref[qi, ki] > 0)
    def _update():
        # Per-head scores for this tile: (H, TQ, TK); bf16 MXU in, f32 accum.
        s = jnp.einsum('hqd,hkd->hqk', q_ref[...], k_ref[...],
                       preferred_element_type=jnp.float32)
        # Mask as a single additive bias per tile (one compare+select shared by
        # all heads) instead of an H-fold where() on the binding VPU slot.
        bias = jnp.where(adj_ref[...] != 0, 0.0, -9e15).astype(jnp.float32)
        s = s + bias[None, :, :]

        m_prev = m_scr[...]
        m_new = jnp.maximum(m_prev, jnp.max(s, axis=-1, keepdims=True))
        alpha = jnp.exp(m_prev - m_new)                      # (H, TQ, 1)
        p = jnp.exp(s - m_new)                               # (H, TQ, TK)
        # v has D+1 columns (last = 1): one matmul yields both the weighted
        # values (cols :D) and the softmax denominator (col D), all f32-accum.
        acc_scr[...] = alpha * acc_scr[...] + jnp.einsum(
            'hqk,hkd->hqd', p.astype(v_ref.dtype), v_ref[...],
            preferred_element_type=jnp.float32)              # (H, TQ, D+1)
        m_scr[...] = m_new

    @pl.when(ki == pl.num_programs(1) - 1)
    def _finalize():
        acc = acc_scr[...]
        # Guard only triggers for rows with no edges at all (padded rows or
        # graphs without self-loops); real rows always have denom >= 1.
        denom = jnp.maximum(acc[..., nhid:], 1e-30)
        ctx = acc[..., :nhid] * pl.reciprocal(denom, approx=False)  # (H, TQ, D)
        # Write the torch.cat([...], dim=1) layout directly (lane-dense slab).
        o_ref[...] = jnp.concatenate(
            [ctx[h] for h in range(nheads)], axis=-1).astype(o_ref.dtype)


# --------------------------------------------------------------------------
# Wrapper
# --------------------------------------------------------------------------
def self_attention_layer_forward(x, adj, wq, bq, wk, bk, wv, bv):
    """x: (N, nfeat); adj: (N, N), edge iff adj > 0;
    per-head weights: (nheads, nfeat, nhid) in x @ W layout; biases: (nheads, nhid).
    Returns (N, nheads * nhid) float32 (torch.cat of per-head GAT outputs)."""
    nheads, nfeat, nhid = wq.shape
    n = x.shape[0]
    hd = nheads * nhid
    n_pad, tq, tk = _choose_tiles(n)
    tn = tq
    inv_sqrt_d = 1.0 / math.sqrt(nhid)
    vmem_limit = _vmem_limit_bytes()

    # ---- one-off weight plumbing (tiny): fused (nfeat, 3*H*D) bf16 matrix ----
    def _flat(w):  # (H, nfeat, D) -> (nfeat, H*D), head-major columns
        return jnp.transpose(w, (1, 0, 2)).reshape(nfeat, hd)

    w_all = jnp.concatenate([_flat(wq), _flat(wk), _flat(wv)],
                            axis=1).astype(jnp.bfloat16)               # (nfeat, 3*H*D)
    b_all = jnp.concatenate(
        [bq.reshape(-1), bk.reshape(-1), bv.reshape(-1)]
    ).astype(jnp.float32)[None, :]                                     # (1, 3*H*D)

    x_bf = x.astype(jnp.bfloat16)
    adj_mask = (adj > 0).astype(jnp.int8)                              # 1 byte/elt
    if n_pad != n:
        # Padded keys carry adj == 0 -> masked out; padded query rows are
        # sliced off at the end.
        x_bf = jnp.pad(x_bf, ((0, n_pad - n), (0, 0)))
        adj_mask = jnp.pad(adj_mask, ((0, n_pad - n), (0, n_pad - n)))

    nq, nk = n_pad // tq, n_pad // tk
    # Per-tile edge counts (scalar-prefetched to SMEM) -> skip fully masked tiles.
    tile_counts = adj_mask.astype(jnp.int32).reshape(nq, tq, nk, tk).sum(axis=(1, 3))

    cparams_proj = pltpu.CompilerParams(
        dimension_semantics=("parallel",), vmem_limit_bytes=vmem_limit)
    cparams_attn = pltpu.CompilerParams(
        dimension_semantics=("parallel", "arbitrary"), vmem_limit_bytes=vmem_limit)

    # ---- Kernel A: fused QKV projection (Q pre-scaled, V gets a ones column) ----
    qk_shape = jax.ShapeDtypeStruct((nheads, n_pad, nhid), jnp.bfloat16)
    v_shape = jax.ShapeDtypeStruct((nheads, n_pad, nhid + 1), jnp.bfloat16)
    q, k, v = pl.pallas_call(
        functools.partial(_qkv_proj_kernel, nheads=nheads, nhid=nhid,
                          inv_sqrt_d=inv_sqrt_d),
        out_shape=(qk_shape, qk_shape, v_shape),
        grid_spec=pltpu.PrefetchScalarGridSpec(
            num_scalar_prefetch=0,
            grid=(n_pad // tn,),
            in_specs=[
                pl.BlockSpec((tn, nfeat), lambda i: (i, 0)),           # x tile
                pl.BlockSpec((nfeat, 3 * hd), lambda i: (0, 0)),       # fused W
                pl.BlockSpec((1, 3 * hd), lambda i: (0, 0)),           # fused bias
            ],
            out_specs=(
                pl.BlockSpec((nheads, tn, nhid), lambda i: (0, i, 0)),
                pl.BlockSpec((nheads, tn, nhid), lambda i: (0, i, 0)),
                pl.BlockSpec((nheads, tn, nhid + 1), lambda i: (0, i, 0)),
            ),
        ),
        compiler_params=cparams_proj,
    )(x_bf, w_all, b_all)

    # ---- Kernel B: tiled masked attention with online softmax + tile skipping ----
    # TODO(synk): optionally emit K in (H, D, N) layout from kernel A for lane-dense
    # K blocks when nhid < 128 (needs MLIR verification that no per-step transpose
    # is inserted), left in the natural (H, N, D) layout here.
    out = pl.pallas_call(
        functools.partial(_flash_gat_kernel, nheads=nheads, nhid=nhid),
        out_shape=jax.ShapeDtypeStruct((n_pad, hd), jnp.float32),
        grid_spec=pltpu.PrefetchScalarGridSpec(
            num_scalar_prefetch=1,                                     # tile_counts
            grid=(nq, nk),
            in_specs=[
                pl.BlockSpec((nheads, tq, nhid), lambda qi, ki, cnt: (0, qi, 0)),     # Q
                pl.BlockSpec((nheads, tk, nhid), lambda qi, ki, cnt: (0, ki, 0)),     # K
                pl.BlockSpec((nheads, tk, nhid + 1), lambda qi, ki, cnt: (0, ki, 0)),  # V|1
                pl.BlockSpec((tq, tk), lambda qi, ki, cnt: (qi, ki)),                 # adj int8
            ],
            out_specs=pl.BlockSpec((tq, hd), lambda qi, ki, cnt: (qi, 0)),
            scratch_shapes=[
                pltpu.VMEM((nheads, tq, 1), jnp.float32),         # running max
                pltpu.VMEM((nheads, tq, nhid + 1), jnp.float32),  # running ctx | denom
            ],
        ),
        compiler_params=cparams_attn,
    )(tile_counts, q, k, v, adj_mask)

    return out[:n]


# --------------------------------------------------------------------------
# Plain-JAX reference (mirrors the PyTorch forward) + self-test
# --------------------------------------------------------------------------
def _reference(x, adj, wq, bq, wk, bk, wv, bv):
    nheads, _, nhid = wq.shape
    outs = []
    for h in range(nheads):
        q = x @ wq[h] + bq[h]
        k = x @ wk[h] + bk[h]
        v = x @ wv[h] + bv[h]
        s = (q @ k.T) / math.sqrt(nhid)
        s = jnp.where(adj > 0, s, -9e15)
        p = jax.nn.softmax(s, axis=-1)
        outs.append(p @ v)
    return jnp.concatenate(outs, axis=1)


def _run_case(seed, N, nfeat, nhid, nheads, adj_dtype, edge_prob=0.6):
    key = jax.random.PRNGKey(seed)
    kx, kadj, kq, kbq, kk, kbk, kv, kbv = jax.random.split(key, 8)

    x = jax.random.normal(kx, (N, nfeat), dtype=jnp.float32)
    adj = (jax.random.uniform(kadj, (N, N)) < edge_prob).astype(jnp.float32)
    adj = jnp.maximum(adj, jnp.eye(N, dtype=jnp.float32))   # self-loops

    bound = 1.0 / math.sqrt(nfeat)
    wq = jax.random.uniform(kq, (nheads, nfeat, nhid), jnp.float32, -bound, bound)
    bq = jax.random.uniform(kbq, (nheads, nhid), jnp.float32, -bound, bound)
    wk = jax.random.uniform(kk, (nheads, nfeat, nhid), jnp.float32, -bound, bound)
    bk = jax.random.uniform(kbk, (nheads, nhid), jnp.float32, -bound, bound)
    wv = jax.random.uniform(kv, (nheads, nfeat, nhid), jnp.float32, -bound, bound)
    bv = jax.random.uniform(kbv, (nheads, nhid), jnp.float32, -bound, bound)

    out = self_attention_layer_forward(x, adj.astype(adj_dtype),
                                       wq, bq, wk, bk, wv, bv)
    out = jax.block_until_ready(out)
    ref = _reference(x, adj, wq, bq, wk, bk, wv, bv)

    assert out.shape == (N, nheads * nhid), out.shape
    # bf16 matmul inputs (f32 accumulation / softmax) -> looser tolerance than f32.
    err = jnp.max(jnp.abs(out - ref))
    assert jnp.allclose(out, ref, atol=2e-2, rtol=2e-2), f"mismatch, max abs err {err}"


if __name__ == "__main__":
    # Small shapes consistent with the module: N nodes, nfeat -> nhid per head.
    _run_case(0, N=8, nfeat=16, nhid=32, nheads=2, adj_dtype=jnp.float32)
    # Padding path (N not a multiple of 128), odd head count, int8 adjacency.
    _run_case(1, N=13, nfeat=24, nhid=16, nheads=3, adj_dtype=jnp.int8)
    # Multi-q-tile path (parallel q axis, scalar-prefetched tile-count table).
    _run_case(2, N=300, nfeat=32, nhid=64, nheads=4, adj_dtype=jnp.float32,
              edge_prob=0.25)
    print("KERNEL_OK")
</pallas_src>

<mosaic_0001>
module attributes {stable_mosaic.version = 11 : i64} {
  func.func @_qkv_proj_kernel(%arg0: i32, %arg1: memref<128x16xbf16, #tpu.memory_space<vmem>>, %arg2: memref<16x192xbf16, #tpu.memory_space<vmem>>, %arg3: memref<1x192xf32, #tpu.memory_space<vmem>>, %arg4: memref<2x128x32xbf16, #tpu.memory_space<vmem>>, %arg5: memref<2x128x32xbf16, #tpu.memory_space<vmem>>, %arg6: memref<2x128x33xbf16, #tpu.memory_space<vmem>>) attributes {dimension_semantics = [#tpu.dimension_semantics<parallel>], iteration_bounds = array<i64: 1>, scalar_prefetch = 0 : i64, scratch_operands = 0 : i64, tpu.core_type = #tpu.core_type<tc>, window_params = [{transform_indices = @transform_0, window_bounds = array<i64: 128, 16>}, {pipeline_mode = #tpu.pipeline_mode<synchronous>, transform_indices = @transform_1, window_bounds = array<i64: 16, 192>}, {pipeline_mode = #tpu.pipeline_mode<synchronous>, transform_indices = @transform_2, window_bounds = array<i64: 1, 192>}, {transform_indices = @transform_3, window_bounds = array<i64: 2, 128, 32>}, {transform_indices = @transform_4, window_bounds = array<i64: 2, 128, 32>}, {transform_indices = @transform_5, window_bounds = array<i64: 2, 128, 33>}]} {
    %c0 = arith.constant 0 : index
    %c0_0 = arith.constant 0 : index
    %0 = vector.load %arg1[%c0, %c0_0] : memref<128x16xbf16, #tpu.memory_space<vmem>>, vector<128x16xbf16>
    %c0_1 = arith.constant 0 : index
    %c0_2 = arith.constant 0 : index
    %1 = vector.load %arg2[%c0_1, %c0_2] : memref<16x192xbf16, #tpu.memory_space<vmem>>, vector<16x192xbf16>
    %cst = arith.constant dense<0.000000e+00> : vector<128x192xf32>
    %2 = tpu.matmul %0, %1, %cst {dimension_numbers = #tpu.dot_dimension_numbers<[1], [0], [0], [1], [0, 0, 1, 1], [], []>} : vector<128x16xbf16>, vector<16x192xbf16>, vector<128x192xf32> -> vector<128x192xf32>
    %c0_3 = arith.constant 0 : index
    %c0_4 = arith.constant 0 : index
    %3 = vector.load %arg3[%c0_3, %c0_4] : memref<1x192xf32, #tpu.memory_space<vmem>>, vector<1x192xf32>
    %4 = vector.broadcast %3 : vector<1x192xf32> to vector<128x192xf32>
    %5 = arith.addf %2, %4 : vector<128x192xf32>
    %6 = vector.extract_strided_slice %5 {offsets = [0, 0], sizes = [128, 64], strides = [1, 1]} : vector<128x192xf32> to vector<128x64xf32>
    %cst_5 = arith.constant 0.176776692 : f32
    %7 = vector.broadcast %cst_5 : f32 to vector<128x64xf32>
    %8 = arith.mulf %6, %7 : vector<128x64xf32>
    %9 = vector.extract_strided_slice %5 {offsets = [0, 64], sizes = [128, 64], strides = [1, 1]} : vector<128x192xf32> to vector<128x64xf32>
    %10 = vector.extract_strided_slice %5 {offsets = [0, 128], sizes = [128, 64], strides = [1, 1]} : vector<128x192xf32> to vector<128x64xf32>
    %cst_6 = arith.constant 1.000000e+00 : f32
    %11 = vector.broadcast %cst_6 : f32 to vector<128x1xf32>
    %12 = vector.extract_strided_slice %8 {offsets = [0, 0], sizes = [128, 32], strides = [1, 1]} : vector<128x64xf32> to vector<128x32xf32>
    %13 = arith.truncf %12 : vector<128x32xf32> to vector<128x32xbf16>
    %c0_7 = arith.constant 0 : index
    %c0_8 = arith.constant 0 : index
    %c0_9 = arith.constant 0 : index
    %14 = vector.load %arg4[%c0_7, %c0_8, %c0_9] : memref<2x128x32xbf16, #tpu.memory_space<vmem>>, vector<1x128x32xbf16>
    %15 = vector.shape_cast %14 : vector<1x128x32xbf16> to vector<128x32xbf16>
    %16 = vector.shape_cast %13 : vector<128x32xbf16> to vector<1x128x32xbf16>
    tpu.vector_store %arg4[%c0_7, %c0_8, %c0_9], %16 {strides = array<i32>} : memref<2x128x32xbf16, #tpu.memory_space<vmem>>, vector<1x128x32xbf16>,
    %17 = vector.extract_strided_slice %9 {offsets = [0, 0], sizes = [128, 32], strides = [1, 1]} : vector<128x64xf32> to vector<128x32xf32>
    %18 = arith.truncf %17 : vector<128x32xf32> to vector<128x32xbf16>
    %c0_10 = arith.constant 0 : index
    %c0_11 = arith.constant 0 : index
    %c0_12 = arith.constant 0 : index
    %19 = vector.load %arg5[%c0_10, %c0_11, %c0_12] : memref<2x128x32xbf16, #tpu.memory_space<vmem>>, vector<1x128x32xbf16>
    %20 = vector.shape_cast %19 : vector<1x128x32xbf16> to vector<128x32xbf16>
    %21 = vector.shape_cast %18 : vector<128x32xbf16> to vector<1x128x32xbf16>
    tpu.vector_store %arg5[%c0_10, %c0_11, %c0_12], %21 {strides = array<i32>} : memref<2x128x32xbf16, #tpu.memory_space<vmem>>, vector<1x128x32xbf16>,
    %22 = vector.extract_strided_slice %10 {offsets = [0, 0], sizes = [128, 32], strides = [1, 1]} : vector<128x64xf32> to vector<128x32xf32>
    %23 = tpu.concatenate %22, %11 in 1 : vector<128x32xf32>, vector<128x1xf32> -> vector<128x33xf32>
    %24 = arith.truncf %23 : vector<128x33xf32> to vector<128x33xbf16>
    %c0_13 = arith.constant 0 : index
    %c0_14 = arith.constant 0 : index
    %c0_15 = arith.constant 0 : index
    %25 = vector.load %arg6[%c0_13, %c0_14, %c0_15] : memref<2x128x33xbf16, #tpu.memory_space<vmem>>, vector<1x128x33xbf16>
    %26 = vector.shape_cast %25 : vector<1x128x33xbf16> to vector<128x33xbf16>
    %27 = vector.shape_cast %24 : vector<128x33xbf16> to vector<1x128x33xbf16>
    tpu.vector_store %arg6[%c0_13, %c0_14, %c0_15], %27 {strides = array<i32>} : memref<2x128x33xbf16, #tpu.memory_space<vmem>>, vector<1x128x33xbf16>,
    %28 = vector.extract_strided_slice %8 {offsets = [0, 32], sizes = [128, 32], strides = [1, 1]} : vector<128x64xf32> to vector<128x32xf32>
    %29 = arith.truncf %28 : vector<128x32xf32> to vector<128x32xbf16>
    %c1 = arith.constant 1 : index
    %c0_16 = arith.constant 0 : index
    %c0_17 = arith.constant 0 : index
    %30 = vector.load %arg4[%c1, %c0_16, %c0_17] : memref<2x128x32xbf16, #tpu.memory_space<vmem>>, vector<1x128x32xbf16>
    %31 = vector.shape_cast %30 : vector<1x128x32xbf16> to vector<128x32xbf16>
    %32 = vector.shape_cast %29 : vector<128x32xbf16> to vector<1x128x32xbf16>
    tpu.vector_store %arg4[%c1, %c0_16, %c0_17], %32 {strides = array<i32>} : memref<2x128x32xbf16, #tpu.memory_space<vmem>>, vector<1x128x32xbf16>,
    %33 = vector.extract_strided_slice %9 {offsets = [0, 32], sizes = [128, 32], strides = [1, 1]} : vector<128x64xf32> to vector<128x32xf32>
    %34 = arith.truncf %33 : vector<128x32xf32> to vector<128x32xbf16>
    %c1_18 = arith.constant 1 : index
    %c0_19 = arith.constant 0 : index
    %c0_20 = arith.constant 0 : index
    %35 = vector.load %arg5[%c1_18, %c0_19, %c0_20] : memref<2x128x32xbf16, #tpu.memory_space<vmem>>, vector<1x128x32xbf16>
    %36 = vector.shape_cast %35 : vector<1x128x32xbf16> to vector<128x32xbf16>
    %37 = vector.shape_cast %34 : vector<128x32xbf16> to vector<1x128x32xbf16>
    tpu.vector_store %arg5[%c1_18, %c0_19, %c0_20], %37 {strides = array<i32>} : memref<2x128x32xbf16, #tpu.memory_space<vmem>>, vector<1x128x32xbf16>,
    %38 = vector.extract_strided_slice %10 {offsets = [0, 32], sizes = [128, 32], strides = [1, 1]} : vector<128x64xf32> to vector<128x32xf32>
    %39 = tpu.concatenate %38, %11 in 1 : vector<128x32xf32>, vector<128x1xf32> -> vector<128x33xf32>
    %40 = arith.truncf %39 : vector<128x33xf32> to vector<128x33xbf16>
    %c1_21 = arith.constant 1 : index
    %c0_22 = arith.constant 0 : index
    %c0_23 = arith.constant 0 : index
    %41 = vector.load %arg6[%c1_21, %c0_22, %c0_23] : memref<2x128x33xbf16, #tpu.memory_space<vmem>>, vector<1x128x33xbf16>
    %42 = vector.shape_cast %41 : vector<1x128x33xbf16> to vector<128x33xbf16>
    %43 = vector.shape_cast %40 : vector<128x33xbf16> to vector<1x128x33xbf16>
    tpu.vector_store %arg6[%c1_21, %c0_22, %c0_23], %43 {strides = array<i32>} : memref<2x128x33xbf16, #tpu.memory_space<vmem>>, vector<1x128x33xbf16>,
    return
  }
  func.func @transform_0(%arg0: i32) -> (i32, i32) {
    %c0_i32 = arith.constant 0 : i32
    %c0_i32_0 = arith.constant 0 : i32
    return %arg0, %c0_i32 : i32, i32
  }
  func.func @transform_1(%arg0: i32) -> (i32, i32) {
    %c0_i32 = arith.constant 0 : i32
    %c0_i32_0 = arith.constant 0 : i32
    %c0_i32_1 = arith.constant 0 : i32
    return %c0_i32, %c0_i32_0 : i32, i32
  }
  func.func @transform_2(%arg0: i32) -> (i32, i32) {
    %c0_i32 = arith.constant 0 : i32
    %c0_i32_0 = arith.constant 0 : i32
    %c0_i32_1 = arith.constant 0 : i32
    return %c0_i32, %c0_i32_0 : i32, i32
  }
  func.func @transform_3(%arg0: i32) -> (i32, i32, i32) {
    %c0_i32 = arith.constant 0 : i32
    %c0_i32_0 = arith.constant 0 : i32
    %c0_i32_1 = arith.constant 0 : i32
    return %c0_i32, %arg0, %c0_i32_0 : i32, i32, i32
  }
  func.func @transform_4(%arg0: i32) -> (i32, i32, i32) {
    %c0_i32 = arith.constant 0 : i32
    %c0_i32_0 = arith.constant 0 : i32
    %c0_i32_1 = arith.constant 0 : i32
    return %c0_i32, %arg0, %c0_i32_0 : i32, i32, i32
  }
  func.func @transform_5(%arg0: i32) -> (i32, i32, i32) {
    %c0_i32 = arith.constant 0 : i32
    %c0_i32_0 = arith.constant 0 : i32
    %c0_i32_1 = arith.constant 0 : i32
    return %c0_i32, %arg0, %c0_i32_0 : i32, i32, i32
  }
}

</mosaic_0001>

<llo_original>
// kernel: tpu_custom_call.1
$region0: #{tpu_custom_call.1}
  #allocation0 [shape = 'u32[]', space=smem, size = 0x4, offset = 0x4, fixed_abs, tag = 'smem constant byte address 0x4 - core index']
  #allocation1 [shape = 'u32[144,128]{1,0:T(1,128)}', space=vmem, size = 0x12000, scoped, tag = 'internal scratch']
  %s0 = inlined_call_operand.vmem [shape: bf16[128,16], index: 0, kind: input, shape index: {}]
  %s1 = inlined_call_operand.vmem [shape: bf16[16,192], index: 1, kind: input, shape index: {}]
  %s2 = inlined_call_operand.vmem [shape: f32[1,192], index: 2, kind: input, shape index: {}]
  %s3 = inlined_call_operand.vmem [shape: bf16[2,128,32], index: 3, kind: output, shape index: {0}]
  %s4 = inlined_call_operand.vmem [shape: bf16[2,128,32], index: 4, kind: output, shape index: {1}]
  %s5 = inlined_call_operand.vmem [shape: bf16[2,128,33], index: 5, kind: output, shape index: {2}]
  %6 = xla_tuple %s3, %s4, %s5
  %s7 = sld [smem:[#allocation0]]
  $region38: #{tpu_custom_call.1} parent=0
    _
  %s9 = ssub.s32 1, %s7
  %s10 = scalar_select 0, %s9, %s7
  // Predicated region
  $region2: #{tpu_custom_call.1} parent=0 // pred_check
    _
  $region3: #{tpu_custom_call.1} parent=0 // pred_check_branch
    %12 = sbr.rel (0) target = $region5
  $region4: #{tpu_custom_call.1} parent=0 // pred_region
    _
  $region5: #{tpu_custom_call.1} parent=0 // pred_fallthru
    _
  // Predicated region
  $region6: #{tpu_custom_call.1} parent=0 // pred_check
    _
  $region7: #{tpu_custom_call.1} parent=0 // pred_check_branch
    %14 = sbr.rel (0) target = $region9
  $region8: #{tpu_custom_call.1} parent=0 // pred_region
    _
  $region9: #{tpu_custom_call.1} parent=0 // pred_fallthru
    _
  // Predicated region
  $region10: #{tpu_custom_call.1} parent=0 // pred_check
    _
  $region11: #{tpu_custom_call.1} parent=0 // pred_check_branch
    %16 = sbr.rel (0) target = $region13
  $region12: #{tpu_custom_call.1} parent=0 // pred_region
    _
  $region13: #{tpu_custom_call.1} parent=0 // pred_fallthru
    _
  %v18 = vld [vmem:[%s0] sm:$0xf]
  %v19 = vld [vmem:[%s0 + $0x4] sm:$0xf]
  %v20 = vld [vmem:[%s0 + $0x8] sm:$0xf]
  %v21 = vld [vmem:[%s0 + $0xc] sm:$0xf]
  %v22 = vld [vmem:[%s0 + $0x10] sm:$0xf]
  %v23 = vld [vmem:[%s0 + $0x14] sm:$0xf]
  %v24 = vld [vmem:[%s0 + $0x18] sm:$0xf]
  %v25 = vld [vmem:[%s0 + $0x1c] sm:$0xf]
  %v26 = vld [vmem:[%s0 + $0x20] sm:$0xf]
  %v27 = vld [vmem:[%s0 + $0x24] sm:$0xf]
  %v28 = vld [vmem:[%s0 + $0x28] sm:$0xf]
  %v29 = vld [vmem:[%s0 + $0x2c] sm:$0xf]
  %v30 = vld [vmem:[%s0 + $0x30] sm:$0xf]
  %v31 = vld [vmem:[%s0 + $0x34] sm:$0xf]
  %v32 = vld [vmem:[%s0 + $0x38] sm:$0xf]
  %v33 = vld [vmem:[%s0 + $0x3c] sm:$0xf]
  %v34 = vld [vmem:[%s1] sm:$0xff]
  %v35 = vld [vmem:[%s1 + $0x8] sm:$0xff]
  %v36 = vld [vmem:[%s2] sm:$0x3]
  %v38 = vlaneseq
  %v39 = vshrl.u32 %v38, 7
  %v40 = vsub.s32 0, %v39
  %v41 = vrot.slane %v36, %v40
  %v42 = vlaneseq
  %v43 = vshrl.u32 %v42, 7
  %v44 = vsub.s32 1, %v43
  %v45 = vrot.slane %v36, %v44
  %v64 = vunpack.c.l.b16 %v18
  %v65 = vunpack.c.l.b16 %v19
  %v66 = vunpack.c.l.b16 %v20
  %v67 = vunpack.c.l.b16 %v21
  %v68 = vunpack.c.l.b16 %v22
  %v69 = vunpack.c.l.b16 %v23
  %v70 = vunpack.c.l.b16 %v24
  %v71 = vunpack.c.l.b16 %v25
  %v72 = vunpack.c.l.b16 %v26
  %v73 = vunpack.c.l.b16 %v27
  %v74 = vunpack.c.l.b16 %v28
  %v75 = vunpack.c.l.b16 %v29
  %v76 = vunpack.c.l.b16 %v30
  %v77 = vunpack.c.l.b16 %v31
  %v78 = vunpack.c.l.b16 %v32
  %v79 = vunpack.c.l.b16 %v33
  %v80 = vpack.c.b16 %v65, %v64
  %v81 = vpack.c.b16 %v67, %v66
  %v82 = vpack.c.b16 %v69, %v68
  %v83 = vpack.c.b16 %v71, %v70
  %v84 = vpack.c.b16 %v73, %v72
  %v85 = vpack.c.b16 %v75, %v74
  %v86 = vpack.c.b16 %v77, %v76
  %v87 = vpack.c.b16 %v79, %v78
  %v90 = vunpack.c.l.b16 %v34
  %v91 = vunpack.c.h.b16 %v34
  %v92 = vunpack.c.l.b16 %v35
  %v93 = vunpack.c.h.b16 %v35
  %v94 = vpack.c.b16 %v92, %v90
  %v95 = vpack.c.b16 %v93, %v91
  %vm98 = vcmask 130048
  %v100 = vsel %vm98, %v80, 0
  %v103 = vsel %vm98, %v81, 0
  %v106 = vsel %vm98, %v82, 0
  %v109 = vsel %vm98, %v83, 0
  %v112 = vsel %vm98, %v84, 0
  %v115 = vsel %vm98, %v85, 0
  %v118 = vsel %vm98, %v86, 0
  %v121 = vsel %vm98, %v87, 0
  %123 = vmatprep.subr.bf16.mxu0 0
  %124 = vmatpush1.bf16.msra.mxu0 0
  %125 = vmatprep.subr.bf16.mxu0 0
  %126 = vmatpush1.bf16.msra.mxu0 0
  %127 = vmatprep.subr.bf16.mxu0 0
  %128 = vmatpush1.bf16.msra.mxu0 0
  %129 = vmatprep.subr.bf16.mxu0 0
  %130 = vmatpush1.bf16.msra.mxu0 0
  %131 = vmatprep.subr.bf16.mxu0 0
  %132 = vmatpush1.bf16.msra.mxu0 0
  %133 = vmatprep.subr.bf16.mxu0 0
  %134 = vmatpush1.bf16.msra.mxu0 0
  %135 = vmatprep.subr.bf16.mxu0 0
  %136 = vmatpush1.bf16.msra.mxu0 0
  %137 = vmatprep.subr.bf16.mxu0 %v95
  %138 = vmatpush1.bf16.msra.mxu0 %v94
  %139 = vmatprep.subr.bf16.mxu0 0
  %140 = vmatpush2.bf16.msra.mxu0 0
  %141 = vmatprep.subr.bf16.mxu0 0
  %142 = vmatpush2.bf16.msra.mxu0 0
  %143 = vmatprep.subr.bf16.mxu0 0
  %144 = vmatpush2.bf16.msra.mxu0 0
  %145 = vmatprep.subr.bf16.mxu0 0
  %146 = vmatpush2.bf16.msra.mxu0 0
  %147 = vmatprep.subr.bf16.mxu0 0
  %148 = vmatpush2.bf16.msra.mxu0 0
  %149 = vmatprep.subr.bf16.mxu0 0
  %150 = vmatpush2.bf16.msra.mxu0 0
  %151 = vmatprep.subr.bf16.mxu0 0
  %152 = vmatpush2.bf16.msra.mxu0 0
  %153 = vmatprep.subr.bf16.mxu0 0
  %154 = vmatpush2.bf16.msra.mxu0 0
  %155 = vmatprep.mubr.bf16.mxu0 0
  %156 = vmatmul.mubr.bf16.gmra.mxu0 %v100
  %v157 = vpop.f32.mrf.mxu0
  %v158 = vadd.f32 %v41, %v157
  %v159 = vpop.f32.mrf.mxu0
  %v160 = vadd.f32 %v45, %v159
  %v161 = vpop.f32.mrf.mxu0
  %v162 = vadd.f32 %v41, %v161
  %v163 = vpop.f32.mrf.mxu0
  %v164 = vadd.f32 %v45, %v163
  %165 = vmatprep.mubr.bf16.mxu0 0
  %166 = vmatmul.mubr.bf16.gmra.mxu0 %v103
  %v167 = vpop.f32.mrf.mxu0
  %v168 = vadd.f32 %v41, %v167
  %v169 = vpop.f32.mrf.mxu0
  %v170 = vadd.f32 %v45, %v169
  %v171 = vpop.f32.mrf.mxu0
  %v172 = vadd.f32 %v41, %v171
  %v173 = vpop.f32.mrf.mxu0
  %v174 = vadd.f32 %v45, %v173
  %175 = vmatprep.mubr.bf16.mxu0 0
  %176 = vmatmul.mubr.bf16.gmra.mxu0 %v106
  %v177 = vpop.f32.mrf.mxu0
  %v178 = vadd.f32 %v41, %v177
  %v179 = vpop.f32.mrf.mxu0
  %v180 = vadd.f32 %v45, %v179
  %v181 = vpop.f32.mrf.mxu0
  %v182 = vadd.f32 %v41, %v181
  %v183 = vpop.f32.mrf.mxu0
  %v184 = vadd.f32 %v45, %v183
  %185 = vmatprep.mubr.bf16.mxu0 0
  %186 = vmatmul.mubr.bf16.gmra.mxu0 %v109
  %v187 = vpop.f32.mrf.mxu0
  %v188 = vadd.f32 %v41, %v187
  %v189 = vpop.f32.mrf.mxu0
  %v190 = vadd.f32 %v45, %v189
  %v191 = vpop.f32.mrf.mxu0
  %v192 = vadd.f32 %v41, %v191
  %v193 = vpop.f32.mrf.mxu0
  %v194 = vadd.f32 %v45, %v193
  %195 = vmatprep.mubr.bf16.mxu0 0
  %196 = vmatmul.mubr.bf16.gmra.mxu0 %v112
  %v197 = vpop.f32.mrf.mxu0
  %v198 = vadd.f32 %v41, %v197
  %v199 = vpop.f32.mrf.mxu0
  %v200 = vadd.f32 %v45, %v199
  %v201 = vpop.f32.mrf.mxu0
  %v202 = vadd.f32 %v41, %v201
  %v203 = vpop.f32.mrf.mxu0
  %v204 = vadd.f32 %v45, %v203
  %205 = vmatprep.mubr.bf16.mxu0 0
  %206 = vmatmul.mubr.bf16.gmra.mxu0 %v115
  %v207 = vpop.f32.mrf.mxu0
  %v208 = vadd.f32 %v41, %v207
  %v209 = vpop.f32.mrf.mxu0
  %v210 = vadd.f32 %v45, %v209
  %v211 = vpop.f32.mrf.mxu0
  %v212 = vadd.f32 %v41, %v211
  %v213 = vpop.f32.mrf.mxu0
  %v214 = vadd.f32 %v45, %v213
  %215 = vmatprep.mubr.bf16.mxu0 0
  %216 = vmatmul.mubr.bf16.gmra.mxu0 %v118
  %v217 = vpop.f32.mrf.mxu0
  %v218 = vadd.f32 %v41, %v217
  %v219 = vpop.f32.mrf.mxu0
  %v220 = vadd.f32 %v45, %v219
  %v221 = vpop.f32.mrf.mxu0
  %v222 = vadd.f32 %v41, %v221
  %v223 = vpop.f32.mrf.mxu0
  %v224 = vadd.f32 %v45, %v223
  %225 = vmatprep.mubr.bf16.mxu0 0
  %226 = vmatmul.mubr.bf16.gmra.mxu0 %v121
  %v227 = vpop.f32.mrf.mxu0
  %v228 = vadd.f32 %v41, %v227
  %v229 = vpop.f32.mrf.mxu0
  %v230 = vadd.f32 %v45, %v229
  %v231 = vpop.f32.mrf.mxu0
  %v232 = vadd.f32 %v41, %v231
  %v233 = vpop.f32.mrf.mxu0
  %v234 = vadd.f32 %v45, %v233
  %235 = vdwg.mxu0
  %v236 = vmul.f32 %v158, 0.17677669
  %v237 = vmul.f32 %v162, 0.17677669
  %v238 = vmul.f32 %v168, 0.17677669
  %v239 = vmul.f32 %v172, 0.17677669
  %v240 = vmul.f32 %v178, 0.17677669
  %v241 = vmul.f32 %v182, 0.17677669
  %v242 = vmul.f32 %v188, 0.17677669
  %v243 = vmul.f32 %v192, 0.17677669
  %v244 = vmul.f32 %v198, 0.17677669
  %v245 = vmul.f32 %v202, 0.17677669
  %v246 = vmul.f32 %v208, 0.17677669
  %v247 = vmul.f32 %v212, 0.17677669
  %v248 = vmul.f32 %v218, 0.17677669
  %v249 = vmul.f32 %v222, 0.17677669
  %v250 = vmul.f32 %v228, 0.17677669
  %v251 = vmul.f32 %v232, 0.17677669
  %v252 = vpack.c.bf16 %v237, %v236
  %v253 = vpack.c.bf16 %v239, %v238
  %v254 = vpack.c.bf16 %v241, %v240
  %v255 = vpack.c.bf16 %v243, %v242
  %v256 = vpack.c.bf16 %v245, %v244
  %v257 = vpack.c.bf16 %v247, %v246
  %v258 = vpack.c.bf16 %v249, %v248
  %v259 = vpack.c.bf16 %v251, %v250
  %v268 = vunpack.c.l.b16 %v252
  %v269 = vunpack.c.h.b16 %v252
  %v270 = vunpack.c.l.b16 %v253
  %v271 = vunpack.c.h.b16 %v253
  %v272 = vunpack.c.l.b16 %v254
  %v273 = vunpack.c.h.b16 %v254
  %v274 = vunpack.c.l.b16 %v255
  %v275 = vunpack.c.h.b16 %v255
  %v276 = vunpack.c.l.b16 %v256
  %v277 = vunpack.c.h.b16 %v256
  %v278 = vunpack.c.l.b16 %v257
  %v279 = vunpack.c.h.b16 %v257
  %v280 = vunpack.c.l.b16 %v258
  %v281 = vunpack.c.h.b16 %v258
  %v282 = vunpack.c.l.b16 %v259
  %v283 = vunpack.c.h.b16 %v259
  %v284 = vpack.c.b16 %v268, %v268
  %v285 = vpack.c.b16 %v269, %v269
  %v286 = vpack.c.b16 %v270, %v270
  %v287 = vpack.c.b16 %v271, %v271
  %v288 = vpack.c.b16 %v272, %v272
  %v289 = vpack.c.b16 %v273, %v273
  %v290 = vpack.c.b16 %v274, %v274
  %v291 = vpack.c.b16 %v275, %v275
  %v292 = vpack.c.b16 %v276, %v276
  %v293 = vpack.c.b16 %v277, %v277
  %v294 = vpack.c.b16 %v278, %v278
  %v295 = vpack.c.b16 %v279, %v279
  %v296 = vpack.c.b16 %v280, %v280
  %v297 = vpack.c.b16 %v281, %v281
  %v298 = vpack.c.b16 %v282, %v282
  %v299 = vpack.c.b16 %v283, %v283
  %vm316 = vcmask 257024
  %317 = vst.msk [vmem:[%s3] sm:$0xf] %vm316, %v284
  %318 = vst.msk [vmem:[%s3 + $0x4] sm:$0xf] %vm316, %v285
  %319 = vst.msk [vmem:[%s3 + $0x8] sm:$0xf] %vm316, %v286
  %320 = vst.msk [vmem:[%s3 + $0xc] sm:$0xf] %vm316, %v287
  %321 = vst.msk [vmem:[%s3 + $0x10] sm:$0xf] %vm316, %v288
  %322 = vst.msk [vmem:[%s3 + $0x14] sm:$0xf] %vm316, %v289
  %323 = vst.msk [vmem:[%s3 + $0x18] sm:$0xf] %vm316, %v290
  %324 = vst.msk [vmem:[%s3 + $0x1c] sm:$0xf] %vm316, %v291
  %325 = vst.msk [vmem:[%s3 + $0x20] sm:$0xf] %vm316, %v292
  %326 = vst.msk [vmem:[%s3 + $0x24] sm:$0xf] %vm316, %v293
  %327 = vst.msk [vmem:[%s3 + $0x28] sm:$0xf] %vm316, %v294
  %328 = vst.msk [vmem:[%s3 + $0x2c] sm:$0xf] %vm316, %v295
  %329 = vst.msk [vmem:[%s3 + $0x30] sm:$0xf] %vm316, %v296
  %330 = vst.msk [vmem:[%s3 + $0x34] sm:$0xf] %vm316, %v297
  %331 = vst.msk [vmem:[%s3 + $0x38] sm:$0xf] %vm316, %v298
  %332 = vst.msk [vmem:[%s3 + $0x3c] sm:$0xf] %vm316, %v299
  %v333 = vpack.c.bf16 %v162, %v158
  %v334 = vpack.c.bf16 %v172, %v168
  %v335 = vpack.c.bf16 %v182, %v178
  %v336 = vpack.c.bf16 %v192, %v188
  %v337 = vpack.c.bf16 %v202, %v198
  %v338 = vpack.c.bf16 %v212, %v208
  %v339 = vpack.c.bf16 %v222, %v218
  %v340 = vpack.c.bf16 %v232, %v228
  %v349 = vunpack.c.l.b16 %v333
  %v350 = vunpack.c.h.b16 %v333
  %v351 = vunpack.c.l.b16 %v334
  %v352 = vunpack.c.h.b16 %v334
  %v353 = vunpack.c.l.b16 %v335
  %v354 = vunpack.c.h.b16 %v335
  %v355 = vunpack.c.l.b16 %v336
  %v356 = vunpack.c.h.b16 %v336
  %v357 = vunpack.c.l.b16 %v337
  %v358 = vunpack.c.h.b16 %v337
  %v359 = vunpack.c.l.b16 %v338
  %v360 = vunpack.c.h.b16 %v338
  %v361 = vunpack.c.l.b16 %v339
  %v362 = vunpack.c.h.b16 %v339
  %v363 = vunpack.c.l.b16 %v340
  %v364 = vunpack.c.h.b16 %v340
  %v365 = vpack.c.b16 %v349, %v349
  %v366 = vpack.c.b16 %v350, %v350
  %v367 = vpack.c.b16 %v351, %v351
  %v368 = vpack.c.b16 %v352, %v352
  %v369 = vpack.c.b16 %v353, %v353
  %v370 = vpack.c.b16 %v354, %v354
  %v371 = vpack.c.b16 %v355, %v355
  %v372 = vpack.c.b16 %v356, %v356
  %v373 = vpack.c.b16 %v357, %v357
  %v374 = vpack.c.b16 %v358, %v358
  %v375 = vpack.c.b16 %v359, %v359
  %v376 = vpack.c.b16 %v360, %v360
  %v377 = vpack.c.b16 %v361, %v361
  %v378 = vpack.c.b16 %v362, %v362
  %v379 = vpack.c.b16 %v363, %v363
  %v380 = vpack.c.b16 %v364, %v364
  %381 = vrot.lane.b32.xlu0 %v365, 64
  %v382 = vpop.permute.xlu0 %381
  %383 = vrot.lane.b32.xlu0 %v366, 64
  %v384 = vpop.permute.xlu0 %383
  %385 = vrot.lane.b32.xlu0 %v367, 64
  %v386 = vpop.permute.xlu0 %385
  %387 = vrot.lane.b32.xlu0 %v368, 64
  %v388 = vpop.permute.xlu0 %387
  %389 = vrot.lane.b32.xlu0 %v369, 64
  %v390 = vpop.permute.xlu0 %389
  %391 = vrot.lane.b32.xlu0 %v370, 64
  %v392 = vpop.permute.xlu0 %391
  %393 = vrot.lane.b32.xlu0 %v371, 64
  %v394 = vpop.permute.xlu0 %393
  %395 = vrot.lane.b32.xlu0 %v372, 64
  %v396 = vpop.permute.xlu0 %395
  %397 = vrot.lane.b32.xlu0 %v373, 64
  %v398 = vpop.permute.xlu0 %397
  %399 = vrot.lane.b32.xlu0 %v374, 64
  %v400 = vpop.permute.xlu0 %399
  %401 = vrot.lane.b32.xlu0 %v375, 64
  %v402 = vpop.permute.xlu0 %401
  %403 = vrot.lane.b32.xlu0 %v376, 64
  %v404 = vpop.permute.xlu0 %403
  %405 = vrot.lane.b32.xlu0 %v377, 64
  %v406 = vpop.permute.xlu0 %405
  %407 = vrot.lane.b32.xlu0 %v378, 64
  %v408 = vpop.permute.xlu0 %407
  %409 = vrot.lane.b32.xlu0 %v379, 64
  %v410 = vpop.permute.xlu0 %409
  %411 = vrot.lane.b32.xlu0 %v380, 64
  %v412 = vpop.permute.xlu0 %411
  %429 = vst.msk [vmem:[%s4] sm:$0xf] %vm316, %v382
  %430 = vst.msk [vmem:[%s4 + $0x4] sm:$0xf] %vm316, %v384
  %431 = vst.msk [vmem:[%s4 + $0x8] sm:$0xf] %vm316, %v386
  %432 = vst.msk [vmem:[%s4 + $0xc] sm:$0xf] %vm316, %v388
  %433 = vst.msk [vmem:[%s4 + $0x10] sm:$0xf] %vm316, %v390
  %434 = vst.msk [vmem:[%s4 + $0x14] sm:$0xf] %vm316, %v392
  %435 = vst.msk [vmem:[%s4 + $0x18] sm:$0xf] %vm316, %v394
  %436 = vst.msk [vmem:[%s4 + $0x1c] sm:$0xf] %vm316, %v396
  %437 = vst.msk [vmem:[%s4 + $0x20] sm:$0xf] %vm316, %v398
  %438 = vst.msk [vmem:[%s4 + $0x24] sm:$0xf] %vm316, %v400
  %439 = vst.msk [vmem:[%s4 + $0x28] sm:$0xf] %vm316, %v402
  %440 = vst.msk [vmem:[%s4 + $0x2c] sm:$0xf] %vm316, %v404
  %441 = vst.msk [vmem:[%s4 + $0x30] sm:$0xf] %vm316, %v406
  %442 = vst.msk [vmem:[%s4 + $0x34] sm:$0xf] %vm316, %v408
  %443 = vst.msk [vmem:[%s4 + $0x38] sm:$0xf] %vm316, %v410
  %444 = vst.msk [vmem:[%s4 + $0x3c] sm:$0xf] %vm316, %v412
  %vm445 = vcmask 261120
  %v446 = vsel %vm445, %v160, 1.0
  %v447 = vsel %vm445, %v164, 1.0
  %v448 = vsel %vm445, %v170, 1.0
  %v449 = vsel %vm445, %v174, 1.0
  %v450 = vsel %vm445, %v180, 1.0
  %v451 = vsel %vm445, %v184, 1.0
  %v452 = vsel %vm445, %v190, 1.0
  %v453 = vsel %vm445, %v194, 1.0
  %v454 = vsel %vm445, %v200, 1.0
  %v455 = vsel %vm445, %v204, 1.0
  %v456 = vsel %vm445, %v210, 1.0
  %v457 = vsel %vm445, %v214, 1.0
  %v458 = vsel %vm445, %v220, 1.0
  %v459 = vsel %vm445, %v224, 1.0
  %v460 = vsel %vm445, %v230, 1.0
  %v461 = vsel %vm445, %v234, 1.0
  %v462 = vpack.c.bf16 %v447, %v446
  %v463 = vpack.c.bf16 %v449, %v448
  %v464 = vpack.c.bf16 %v451, %v450
  %v465 = vpack.c.bf16 %v453, %v452
  %v466 = vpack.c.bf16 %v455, %v454
  %v467 = vpack.c.bf16 %v457, %v456
  %v468 = vpack.c.bf16 %v459, %v458
  %v469 = vpack.c.bf16 %v461, %v460
  %v478 = vunpack.c.l.b16 %v462
  %v479 = vunpack.c.h.b16 %v462
  %v480 = vunpack.c.l.b16 %v463
  %v481 = vunpack.c.h.b16 %v463
  %v482 = vunpack.c.l.b16 %v464
  %v483 = vunpack.c.h.b16 %v464
  %v484 = vunpack.c.l.b16 %v465
  %v485 = vunpack.c.h.b16 %v465
  %v486 = vunpack.c.l.b16 %v466
  %v487 = vunpack.c.h.b16 %v466
  %v488 = vunpack.c.l.b16 %v467
  %v489 = vunpack.c.h.b16 %v467
  %v490 = vunpack.c.l.b16 %v468
  %v491 = vunpack.c.h.b16 %v468
  %v492 = vunpack.c.l.b16 %v469
  %v493 = vunpack.c.h.b16 %v469
  %v494 = vpack.c.b16 %v478, %v478
  %v495 = vpack.c.b16 %v479, %v479
  %v496 = vpack.c.b16 %v480, %v480
  %v497 = vpack.c.b16 %v481, %v481
  %v498 = vpack.c.b16 %v482, %v482
  %v499 = vpack.c.b16 %v483, %v483
  %v500 = vpack.c.b16 %v484, %v484
  %v501 = vpack.c.b16 %v485, %v485
  %v502 = vpack.c.b16 %v486, %v486
  %v503 = vpack.c.b16 %v487, %v487
  %v504 = vpack.c.b16 %v488, %v488
  %v505 = vpack.c.b16 %v489, %v489
  %v506 = vpack.c.b16 %v490, %v490
  %v507 = vpack.c.b16 %v491, %v491
  %v508 = vpack.c.b16 %v492, %v492
  %v509 = vpack.c.b16 %v493, %v493
  %vm526 = vcmask 265216
  %527 = vst.msk [vmem:[%s5] sm:$0xf] %vm526, %v494
  %528 = vst.msk [vmem:[%s5 + $0x4] sm:$0xf] %vm526, %v495
  %529 = vst.msk [vmem:[%s5 + $0x8] sm:$0xf] %vm526, %v496
  %530 = vst.msk [vmem:[%s5 + $0xc] sm:$0xf] %vm526, %v497
  %531 = vst.msk [vmem:[%s5 + $0x10] sm:$0xf] %vm526, %v498
  %532 = vst.msk [vmem:[%s5 + $0x14] sm:$0xf] %vm526, %v499
  %533 = vst.msk [vmem:[%s5 + $0x18] sm:$0xf] %vm526, %v500
  %534 = vst.msk [vmem:[%s5 + $0x1c] sm:$0xf] %vm526, %v501
  %535 = vst.msk [vmem:[%s5 + $0x20] sm:$0xf] %vm526, %v502
  %536 = vst.msk [vmem:[%s5 + $0x24] sm:$0xf] %vm526, %v503
  %537 = vst.msk [vmem:[%s5 + $0x28] sm:$0xf] %vm526, %v504
  %538 = vst.msk [vmem:[%s5 + $0x2c] sm:$0xf] %vm526, %v505
  %539 = vst.msk [vmem:[%s5 + $0x30] sm:$0xf] %vm526, %v506
  %540 = vst.msk [vmem:[%s5 + $0x34] sm:$0xf] %vm526, %v507
  %541 = vst.msk [vmem:[%s5 + $0x38] sm:$0xf] %vm526, %v508
  %542 = vst.msk [vmem:[%s5 + $0x3c] sm:$0xf] %vm526, %v509
  %543 = vrot.lane.b32.xlu0 %v284, 96
  %v544 = vpop.permute.xlu0 %543
  %545 = vrot.lane.b32.xlu0 %v285, 96
  %v546 = vpop.permute.xlu0 %545
  %547 = vrot.lane.b32.xlu0 %v286, 96
  %v548 = vpop.permute.xlu0 %547
  %549 = vrot.lane.b32.xlu0 %v287, 96
  %v550 = vpop.permute.xlu0 %549
  %551 = vrot.lane.b32.xlu0 %v288, 96
  %v552 = vpop.permute.xlu0 %551
  %553 = vrot.lane.b32.xlu0 %v289, 96
  %v554 = vpop.permute.xlu0 %553
  %555 = vrot.lane.b32.xlu0 %v290, 96
  %v556 = vpop.permute.xlu0 %555
  %557 = vrot.lane.b32.xlu0 %v291, 96
  %v558 = vpop.permute.xlu0 %557
  %559 = vrot.lane.b32.xlu0 %v292, 96
  %v560 = vpop.permute.xlu0 %559
  %561 = vrot.lane.b32.xlu0 %v293, 96
  %v562 = vpop.permute.xlu0 %561
  %563 = vrot.lane.b32.xlu0 %v294, 96
  %v564 = vpop.permute.xlu0 %563
  %565 = vrot.lane.b32.xlu0 %v295, 96
  %v566 = vpop.permute.xlu0 %565
  %567 = vrot.lane.b32.xlu0 %v296, 96
  %v568 = vpop.permute.xlu0 %567
  %569 = vrot.lane.b32.xlu0 %v297, 96
  %v570 = vpop.permute.xlu0 %569
  %571 = vrot.lane.b32.xlu0 %v298, 96
  %v572 = vpop.permute.xlu0 %571
  %573 = vrot.lane.b32.xlu0 %v299, 96
  %v574 = vpop.permute.xlu0 %573
  %s591 = scalar_lea.vmem %s3, 64
  %592 = vst.msk [vmem:[%s591] sm:$0xf] %vm316, %v544
  %593 = vst.msk [vmem:[%s591 + $0x4] sm:$0xf] %vm316, %v546
  %594 = vst.msk [vmem:[%s591 + $0x8] sm:$0xf] %vm316, %v548
  %595 = vst.msk [vmem:[%s591 + $0xc] sm:$0xf] %vm316, %v550
  %596 = vst.msk [vmem:[%s591 + $0x10] sm:$0xf] %vm316, %v552
  %597 = vst.msk [vmem:[%s591 + $0x14] sm:$0xf] %vm316, %v554
  %598 = vst.msk [vmem:[%s591 + $0x18] sm:$0xf] %vm316, %v556
  %599 = vst.msk [vmem:[%s591 + $0x1c] sm:$0xf] %vm316, %v558
  %600 = vst.msk [vmem:[%s591 + $0x20] sm:$0xf] %vm316, %v560
  %601 = vst.msk [vmem:[%s591 + $0x24] sm:$0xf] %vm316, %v562
  %602 = vst.msk [vmem:[%s591 + $0x28] sm:$0xf] %vm316, %v564
  %603 = vst.msk [vmem:[%s591 + $0x2c] sm:$0xf] %vm316, %v566
  %604 = vst.msk [vmem:[%s591 + $0x30] sm:$0xf] %vm316, %v568
  %605 = vst.msk [vmem:[%s591 + $0x34] sm:$0xf] %vm316, %v570
  %606 = vst.msk [vmem:[%s591 + $0x38] sm:$0xf] %vm316, %v572
  %607 = vst.msk [vmem:[%s591 + $0x3c] sm:$0xf] %vm316, %v574
  %608 = vrot.lane.b32.xlu0 %v365, 32
  %v609 = vpop.permute.xlu0 %608
  %610 = vrot.lane.b32.xlu0 %v366, 32
  %v611 = vpop.permute.xlu0 %610
  %612 = vrot.lane.b32.xlu0 %v367, 32
  %v613 = vpop.permute.xlu0 %612
  %614 = vrot.lane.b32.xlu0 %v368, 32
  %v615 = vpop.permute.xlu0 %614
  %616 = vrot.lane.b32.xlu0 %v369, 32
  %v617 = vpop.permute.xlu0 %616
  %618 = vrot.lane.b32.xlu0 %v370, 32
  %v619 = vpop.permute.xlu0 %618
  %620 = vrot.lane.b32.xlu0 %v371, 32
  %v621 = vpop.permute.xlu0 %620
  %622 = vrot.lane.b32.xlu0 %v372, 32
  %v623 = vpop.permute.xlu0 %622
  %624 = vrot.lane.b32.xlu0 %v373, 32
  %v625 = vpop.permute.xlu0 %624
  %626 = vrot.lane.b32.xlu0 %v374, 32
  %v627 = vpop.permute.xlu0 %626
  %628 = vrot.lane.b32.xlu0 %v375, 32
  %v629 = vpop.permute.xlu0 %628
  %630 = vrot.lane.b32.xlu0 %v376, 32
  %v631 = vpop.permute.xlu0 %630
  %632 = vrot.lane.b32.xlu0 %v377, 32
  %v633 = vpop.permute.xlu0 %632
  %634 = vrot.lane.b32.xlu0 %v378, 32
  %v635 = vpop.permute.xlu0 %634
  %636 = vrot.lane.b32.xlu0 %v379, 32
  %v637 = vpop.permute.xlu0 %636
  %638 = vrot.lane.b32.xlu0 %v380, 32
  %v639 = vpop.permute.xlu0 %638
  %s656 = scalar_lea.vmem %s4, 64
  %657 = vst.msk [vmem:[%s656] sm:$0xf] %vm316, %v609
  %658 = vst.msk [vmem:[%s656 + $0x4] sm:$0xf] %vm316, %v611
  %659 = vst.msk [vmem:[%s656 + $0x8] sm:$0xf] %vm316, %v613
  %660 = vst.msk [vmem:[%s656 + $0xc] sm:$0xf] %vm316, %v615
  %661 = vst.msk [vmem:[%s656 + $0x10] sm:$0xf] %vm316, %v617
  %662 = vst.msk [vmem:[%s656 + $0x14] sm:$0xf] %vm316, %v619
  %663 = vst.msk [vmem:[%s656 + $0x18] sm:$0xf] %vm316, %v621
  %664 = vst.msk [vmem:[%s656 + $0x1c] sm:$0xf] %vm316, %v623
  %665 = vst.msk [vmem:[%s656 + $0x20] sm:$0xf] %vm316, %v625
  %666 = vst.msk [vmem:[%s656 + $0x24] sm:$0xf] %vm316, %v627
  %667 = vst.msk [vmem:[%s656 + $0x28] sm:$0xf] %vm316, %v629
  %668 = vst.msk [vmem:[%s656 + $0x2c] sm:$0xf] %vm316, %v631
  %669 = vst.msk [vmem:[%s656 + $0x30] sm:$0xf] %vm316, %v633
  %670 = vst.msk [vmem:[%s656 + $0x34] sm:$0xf] %vm316, %v635
  %671 = vst.msk [vmem:[%s656 + $0x38] sm:$0xf] %vm316, %v637
  %672 = vst.msk [vmem:[%s656 + $0x3c] sm:$0xf] %vm316, %v639
  %689 = vrot.lane.b32.xlu0 %v160, 96
  %v690 = vpop.permute.xlu0 %689
  %691 = vrot.lane.b32.xlu0 %v164, 96
  %v692 = vpop.permute.xlu0 %691
  %693 = vrot.lane.b32.xlu0 %v170, 96
  %v694 = vpop.permute.xlu0 %693
  %695 = vrot.lane.b32.xlu0 %v174, 96
  %v696 = vpop.permute.xlu0 %695
  %697 = vrot.lane.b32.xlu0 %v180, 96
  %v698 = vpop.permute.xlu0 %697
  %699 = vrot.lane.b32.xlu0 %v184, 96
  %v700 = vpop.permute.xlu0 %699
  %701 = vrot.lane.b32.xlu0 %v190, 96
  %v702 = vpop.permute.xlu0 %701
  %703 = vrot.lane.b32.xlu0 %v194, 96
  %v704 = vpop.permute.xlu0 %703
  %705 = vrot.lane.b32.xlu0 %v200, 96
  %v706 = vpop.permute.xlu0 %705
  %707 = vrot.lane.b32.xlu0 %v204, 96
  %v708 = vpop.permute.xlu0 %707
  %709 = vrot.lane.b32.xlu0 %v210, 96
  %v710 = vpop.permute.xlu0 %709
  %711 = vrot.lane.b32.xlu0 %v214, 96
  %v712 = vpop.permute.xlu0 %711
  %713 = vrot.lane.b32.xlu0 %v220, 96
  %v714 = vpop.permute.xlu0 %713
  %715 = vrot.lane.b32.xlu0 %v224, 96
  %v716 = vpop.permute.xlu0 %715
  %717 = vrot.lane.b32.xlu0 %v230, 96
  %v718 = vpop.permute.xlu0 %717
  %719 = vrot.lane.b32.xlu0 %v234, 96
  %v720 = vpop.permute.xlu0 %719
  %v737 = vsel %vm445, %v690, 1.0
  %v738 = vsel %vm445, %v692, 1.0
  %v739 = vsel %vm445, %v694, 1.0
  %v740 = vsel %vm445, %v696, 1.0
  %v741 = vsel %vm445, %v698, 1.0
  %v742 = vsel %vm445, %v700, 1.0
  %v743 = vsel %vm445, %v702, 1.0
  %v744 = vsel %vm445, %v704, 1.0
  %v745 = vsel %vm445, %v706, 1.0
  %v746 = vsel %vm445, %v708, 1.0
  %v747 = vsel %vm445, %v710, 1.0
  %v748 = vsel %vm445, %v712, 1.0
  %v749 = vsel %vm445, %v714, 1.0
  %v750 = vsel %vm445, %v716, 1.0
  %v751 = vsel %vm445, %v718, 1.0
  %v752 = vsel %vm445, %v720, 1.0
  %v753 = vpack.c.bf16 %v738, %v737
  %v754 = vpack.c.bf16 %v740, %v739
  %v755 = vpack.c.bf16 %v742, %v741
  %v756 = vpack.c.bf16 %v744, %v743
  %v757 = vpack.c.bf16 %v746, %v745
  %v758 = vpack.c.bf16 %v748, %v747
  %v759 = vpack.c.bf16 %v750, %v749
  %v760 = vpack.c.bf16 %v752, %v751
  %v769 = vunpack.c.l.b16 %v753
  %v770 = vunpack.c.h.b16 %v753
  %v771 = vunpack.c.l.b16 %v754
  %v772 = vunpack.c.h.b16 %v754
  %v773 = vunpack.c.l.b16 %v755
  %v774 = vunpack.c.h.b16 %v755
  %v775 = vunpack.c.l.b16 %v756
  %v776 = vunpack.c.h.b16 %v756
  %v777 = vunpack.c.l.b16 %v757
  %v778 = vunpack.c.h.b16 %v757
  %v779 = vunpack.c.l.b16 %v758
  %v780 = vunpack.c.h.b16 %v758
  %v781 = vunpack.c.l.b16 %v759
  %v782 = vunpack.c.h.b16 %v759
  %v783 = vunpack.c.l.b16 %v760
  %v784 = vunpack.c.h.b16 %v760
  %v785 = vpack.c.b16 %v769, %v769
  %v786 = vpack.c.b16 %v770, %v770
  %v787 = vpack.c.b16 %v771, %v771
  %v788 = vpack.c.b16 %v772, %v772
  %v789 = vpack.c.b16 %v773, %v773
  %v790 = vpack.c.b16 %v774, %v774
  %v791 = vpack.c.b16 %v775, %v775
  %v792 = vpack.c.b16 %v776, %v776
  %v793 = vpack.c.b16 %v777, %v777
  %v794 = vpack.c.b16 %v778, %v778
  %v795 = vpack.c.b16 %v779, %v779
  %v796 = vpack.c.b16 %v780, %v780
  %v797 = vpack.c.b16 %v781, %v781
  %v798 = vpack.c.b16 %v782, %v782
  %v799 = vpack.c.b16 %v783, %v783
  %v800 = vpack.c.b16 %v784, %v784
  %s817 = scalar_lea.vmem %s5, 64
  %818 = vst.msk [vmem:[%s817] sm:$0xf] %vm526, %v785
  %819 = vst.msk [vmem:[%s817 + $0x4] sm:$0xf] %vm526, %v786
  %820 = vst.msk [vmem:[%s817 + $0x8] sm:$0xf] %vm526, %v787
  %821 = vst.msk [vmem:[%s817 + $0xc] sm:$0xf] %vm526, %v788
  %822 = vst.msk [vmem:[%s817 + $0x10] sm:$0xf] %vm526, %v789
  %823 = vst.msk [vmem:[%s817 + $0x14] sm:$0xf] %vm526, %v790
  %824 = vst.msk [vmem:[%s817 + $0x18] sm:$0xf] %vm526, %v791
  %825 = vst.msk [vmem:[%s817 + $0x1c] sm:$0xf] %vm526, %v792
  %826 = vst.msk [vmem:[%s817 + $0x20] sm:$0xf] %vm526, %v793
  %827 = vst.msk [vmem:[%s817 + $0x24] sm:$0xf] %vm526, %v794
  %828 = vst.msk [vmem:[%s817 + $0x28] sm:$0xf] %vm526, %v795
  %829 = vst.msk [vmem:[%s817 + $0x2c] sm:$0xf] %vm526, %v796
  %830 = vst.msk [vmem:[%s817 + $0x30] sm:$0xf] %vm526, %v797
  %831 = vst.msk [vmem:[%s817 + $0x34] sm:$0xf] %vm526, %v798
  %832 = vst.msk [vmem:[%s817 + $0x38] sm:$0xf] %vm526, %v799
  %833 = vst.msk [vmem:[%s817 + $0x3c] sm:$0xf] %vm526, %v800
  // Predicated region
  $region14: #{tpu_custom_call.1} parent=0 // pred_check
    _
  $region15: #{tpu_custom_call.1} parent=0 // pred_check_branch
    %835 = sbr.rel (0) target = $region17
  $region16: #{tpu_custom_call.1} parent=0 // pred_region
    _
  $region17: #{tpu_custom_call.1} parent=0 // pred_fallthru
    _
  // Predicated region
  $region18: #{tpu_custom_call.1} parent=0 // pred_check
    _
  $region19: #{tpu_custom_call.1} parent=0 // pred_check_branch
    %837 = sbr.rel (0) target = $region21
  $region20: #{tpu_custom_call.1} parent=0 // pred_region
    _
  $region21: #{tpu_custom_call.1} parent=0 // pred_fallthru
    _
  // Predicated region
  $region22: #{tpu_custom_call.1} parent=0 // pred_check
    _
  $region23: #{tpu_custom_call.1} parent=0 // pred_check_branch
    %839 = sbr.rel (0) target = $region25
  $region24: #{tpu_custom_call.1} parent=0 // pred_region
    _
  $region25: #{tpu_custom_call.1} parent=0 // pred_fallthru
    _
  // Predicated region
  $region26: #{tpu_custom_call.1} parent=0 // pred_check
    _
  $region27: #{tpu_custom_call.1} parent=0 // pred_check_branch
    %841 = sbr.rel (0) target = $region29
  $region28: #{tpu_custom_call.1} parent=0 // pred_region
    _
  $region29: #{tpu_custom_call.1} parent=0 // pred_fallthru
    _
  // Predicated region
  $region30: #{tpu_custom_call.1} parent=0 // pred_check
    _
  $region31: #{tpu_custom_call.1} parent=0 // pred_check_branch
    %843 = sbr.rel (0) target = $region33
  $region32: #{tpu_custom_call.1} parent=0 // pred_region
    _
  $region33: #{tpu_custom_call.1} parent=0 // pred_fallthru
    _
  // Predicated region
  $region34: #{tpu_custom_call.1} parent=0 // pred_check
    _
  $region35: #{tpu_custom_call.1} parent=0 // pred_check_branch
    %845 = sbr.rel (0) target = $region37
  $region36: #{tpu_custom_call.1} parent=0 // pred_region
    _
  $region37: #{tpu_custom_call.1} parent=0 // pred_fallthru
    _

</llo_original>
